<compile_context>
chip_gen: v5e
topology: v5e:2x2
jax: 0.10.0
libtpu: 0.0.40
codegen_flags: <defaults>
</compile_context>

<pallas_src>
import jax
import jax.numpy as jnp
import numpy as np
from jax.experimental import pallas as pl
from jax.experimental.pallas import tpu as pltpu

# ----------------------------------------------------------------------------
# Static problem sizes (FNN(hidden_dim=dim + 10, num_hidden=2) per the module).
# ----------------------------------------------------------------------------
DIM = 8
HIDDEN = DIM + 10          # 18
H2 = 2 * HIDDEN            # 36   (fused u- and z-network hidden width)
HP = 128                   # lane-padded compute width (cols 36:128 are zero)
OUT_W = DIM + 1            # 9    (fused output: z in cols 0:DIM, y in col DIM)

# Sublane(8)-aligned row offsets inside the single packed parameter buffer.
R_W1 = 0                   # (DIM, HP)
R_W2 = 8                   # (HP,  HP)   rows 36:128 zero
R_W3 = R_W2 + HP           # 136, (HP, HP)
R_B1 = R_W3 + HP           # 264, (1, HP)
R_B2 = R_B1 + 8            # 272, (1, HP)
R_B3 = R_B2 + 8            # 280, (1, HP)
R_TOT = R_B3 + 8           # 288  -> (288, 128) f32 = 144 KiB, one contiguous DMA


# ----------------------------------------------------------------------------
# Kernel
# ----------------------------------------------------------------------------
def dbdp1_kernel(s_ref, xdw_ref, p_ref, out_ref):
    # s_ref: (2,) f32 in SMEM, [t, dt].  t is carried for interface fidelity
    # but the placeholder driver does not use it.
    dt = s_ref[1]

    x = xdw_ref[0]                         # (B, DIM)
    dw = xdw_ref[1]                        # (B, DIM)

    # Static, 8-aligned, full-lane-width views of the packed parameter buffer.
    w1 = p_ref[R_W1:R_W1 + DIM, :]         # (DIM, HP) = [uw1 | zw1 | 0]
    w2 = p_ref[R_W2:R_W2 + HP, :]          # (HP,  HP) = blockdiag(uw2, zw2), 0-padded
    w3 = p_ref[R_W3:R_W3 + HP, :]          # (HP,  HP) = fused output weights, 0-padded
    b1 = p_ref[R_B1:R_B1 + 1, :]           # (1, HP)
    b2 = p_ref[R_B2:R_B2 + 1, :]           # (1, HP)
    b3 = p_ref[R_B3:R_B3 + 1, :]           # (1, HP)

    # Fused u/z network: Linear -> tanh -> Linear -> tanh -> Linear.
    # Zero-padded lanes stay exactly zero through every layer.
    h1 = jnp.tanh(jnp.dot(x, w1, preferred_element_type=jnp.float32) + b1)
    h2 = jnp.tanh(jnp.dot(h1, w2, preferred_element_type=jnp.float32) + b2)
    h3 = jnp.dot(h2, w3, preferred_element_type=jnp.float32) + b3     # (B, HP)

    z = h3[:, :DIM]                        # z_network(x) -> (B, DIM)
    y = h3[:, DIM:DIM + 1]                 # u_network(x) -> (B, 1)

    # out = y - f(t,x,y,z)*dt + <z, dw>, with the placeholder driver
    # f = 0.1*y + 0.5*||z||^2, merged into one lane reduction:
    out_ref[...] = (y * (1.0 - 0.1 * dt)
                    + jnp.sum(z * (dw - 0.5 * dt * z), axis=-1, keepdims=True))


# ----------------------------------------------------------------------------
# Wrapper
# ----------------------------------------------------------------------------
@jax.jit
def dbdp1_forward(t, dt, x, dw, packed_params):
    B = x.shape[0]
    scalars = jnp.stack([jnp.asarray(t, jnp.float32),
                         jnp.asarray(dt, jnp.float32)])          # (2,)  -> SMEM
    xdw = jnp.stack([x, dw]).astype(jnp.float32)                 # (2,B,DIM) -> VMEM

    flops = 2 * B * (DIM * HP + HP * HP + HP * HP)
    transcendentals = 2 * B * HP
    bytes_accessed = 4 * (2 + 2 * B * DIM + R_TOT * HP + B)

    return pl.pallas_call(
        dbdp1_kernel,
        out_shape=jax.ShapeDtypeStruct((B, 1), jnp.float32),
        in_specs=[
            pl.BlockSpec(memory_space=pltpu.MemorySpace.SMEM),   # [t, dt]
            pl.BlockSpec(memory_space=pltpu.MemorySpace.VMEM),   # stacked x/dw
            pl.BlockSpec(memory_space=pltpu.MemorySpace.VMEM),   # packed params
        ],
        out_specs=pl.BlockSpec(memory_space=pltpu.MemorySpace.VMEM),
        cost_estimate=pl.CostEstimate(flops=flops,
                                      transcendentals=transcendentals,
                                      bytes_accessed=bytes_accessed),
    )(scalars, xdw, packed_params)


# ----------------------------------------------------------------------------
# Parameter init / host-side packing (done once, at "module construction" time)
# ----------------------------------------------------------------------------
def init_fnn_params(key, in_dim, hidden_dim, out_dim):
    """Deterministic init for an FNN with 2 hidden layers (nonzero biases so
    the bias packing is actually exercised)."""
    k = jax.random.split(key, 6)

    def lin(kw, kb, fan_in, fan_out):
        w = jax.random.normal(kw, (fan_in, fan_out), jnp.float32) / np.sqrt(fan_in)
        b = 0.1 * jax.random.normal(kb, (1, fan_out), jnp.float32)
        return w, b

    w1, b1 = lin(k[0], k[1], in_dim, hidden_dim)
    w2, b2 = lin(k[2], k[3], hidden_dim, hidden_dim)
    w3, b3 = lin(k[4], k[5], hidden_dim, out_dim)
    return (w1, b1, w2, b2, w3, b3)


def pack_params(u_params, z_params):
    """Fuse u/z networks (concat layer 1, block-diagonal layers 2/3) and pack
    all weights + biases into ONE sublane-aligned, 128-lane-padded f32 buffer
    so the kernel does a single contiguous parameter DMA."""
    uw1, ub1, uw2, ub2, uw3, ub3 = [np.asarray(a, np.float32) for a in u_params]
    zw1, zb1, zw2, zb2, zw3, zb3 = [np.asarray(a, np.float32) for a in z_params]

    p = np.zeros((R_TOT, HP), np.float32)

    # Layer 1: hidden cols 0:HIDDEN -> u-net, HIDDEN:H2 -> z-net.
    p[R_W1:R_W1 + DIM, 0:HIDDEN] = uw1
    p[R_W1:R_W1 + DIM, HIDDEN:H2] = zw1
    p[R_B1:R_B1 + 1, 0:HIDDEN] = ub1
    p[R_B1:R_B1 + 1, HIDDEN:H2] = zb1

    # Layer 2: block-diagonal.
    p[R_W2:R_W2 + HIDDEN, 0:HIDDEN] = uw2
    p[R_W2 + HIDDEN:R_W2 + H2, HIDDEN:H2] = zw2
    p[R_B2:R_B2 + 1, 0:HIDDEN] = ub2
    p[R_B2:R_B2 + 1, HIDDEN:H2] = zb2

    # Layer 3 (fused output): cols 0:DIM -> z, col DIM -> y.
    p[R_W3:R_W3 + HIDDEN, DIM:DIM + 1] = uw3
    p[R_W3 + HIDDEN:R_W3 + H2, 0:DIM] = zw3
    p[R_B3:R_B3 + 1, 0:DIM] = zb3
    p[R_B3:R_B3 + 1, DIM:DIM + 1] = ub3

    return jnp.asarray(p)


# ----------------------------------------------------------------------------
# Pure-JAX reference (unfused, mirrors the original module structure)
# ----------------------------------------------------------------------------
def _mlp_ref(x, w1, b1, w2, b2, w3, b3):
    h1 = jnp.tanh(x @ w1 + b1)
    h2 = jnp.tanh(h1 @ w2 + b2)
    return h2 @ w3 + b3


def reference_forward(t, dt, x, dw, u_params, z_params):
    y = _mlp_ref(x, *u_params)                                   # (B, 1)
    z = _mlp_ref(x, *z_params)                                   # (B, DIM)
    # Same placeholder driver as the kernel (no explicit t term).
    f = 0.1 * y + 0.5 * jnp.sum(z * z, axis=-1, keepdims=True)
    zdw = jnp.sum(z * dw, axis=-1, keepdims=True)
    return y - f * dt + zdw


if __name__ == "__main__":
    B = 16

    key = jax.random.PRNGKey(0)
    kx, kdw, ku, kz = jax.random.split(key, 4)

    x = jax.random.normal(kx, (B, DIM), jnp.float32)
    dw = jax.random.normal(kdw, (B, DIM), jnp.float32) * jnp.sqrt(0.05)
    t = jnp.asarray(0.25, jnp.float32)
    dt = jnp.asarray(0.05, jnp.float32)

    u_params = init_fnn_params(ku, DIM, HIDDEN, 1)    # u_network: dim -> 1
    z_params = init_fnn_params(kz, DIM, HIDDEN, DIM)  # z_network: dim -> dim
    packed = pack_params(u_params, z_params)          # one-time host-side pack

    out = jax.block_until_ready(dbdp1_forward(t, dt, x, dw, packed))

    ref = reference_forward(t, dt, x, dw, u_params, z_params)
    assert out.shape == (B, 1)
    assert np.allclose(np.asarray(out), np.asarray(ref), rtol=1e-5, atol=1e-5)

    print("KERNEL_OK")
</pallas_src>

<mosaic_0001>
module attributes {stable_mosaic.version = 11 : i64} {
  func.func @dbdp1_kernel(%arg0: memref<2xf32, #tpu.memory_space<smem>>, %arg1: memref<2x16x8xf32, #tpu.memory_space<vmem>>, %arg2: memref<288x128xf32, #tpu.memory_space<vmem>>, %arg3: memref<16x1xf32, #tpu.memory_space<vmem>>) attributes {dimension_semantics = [], scalar_prefetch = 0 : i64, scratch_operands = 0 : i64, tpu.core_type = #tpu.core_type<tc>} {
    %c1 = arith.constant 1 : index
    %0 = memref.load %arg0[%c1] : memref<2xf32, #tpu.memory_space<smem>>
    %c0 = arith.constant 0 : index
    %c0_0 = arith.constant 0 : index
    %c0_1 = arith.constant 0 : index
    %1 = vector.load %arg1[%c0, %c0_0, %c0_1] : memref<2x16x8xf32, #tpu.memory_space<vmem>>, vector<1x16x8xf32>
    %2 = vector.shape_cast %1 : vector<1x16x8xf32> to vector<16x8xf32>
    %c1_2 = arith.constant 1 : index
    %c0_3 = arith.constant 0 : index
    %c0_4 = arith.constant 0 : index
    %3 = vector.load %arg1[%c1_2, %c0_3, %c0_4] : memref<2x16x8xf32, #tpu.memory_space<vmem>>, vector<1x16x8xf32>
    %4 = vector.shape_cast %3 : vector<1x16x8xf32> to vector<16x8xf32>
    %c0_5 = arith.constant 0 : index
    %c0_6 = arith.constant 0 : index
    %5 = vector.load %arg2[%c0_5, %c0_6] : memref<288x128xf32, #tpu.memory_space<vmem>>, vector<8x128xf32>
    %c8 = arith.constant 8 : index
    %c0_7 = arith.constant 0 : index
    %6 = vector.load %arg2[%c8, %c0_7] : memref<288x128xf32, #tpu.memory_space<vmem>>, vector<128x128xf32>
    %c136 = arith.constant 136 : index
    %c0_8 = arith.constant 0 : index
    %7 = vector.load %arg2[%c136, %c0_8] : memref<288x128xf32, #tpu.memory_space<vmem>>, vector<128x128xf32>
    %c264 = arith.constant 264 : index
    %c0_9 = arith.constant 0 : index
    %8 = vector.load %arg2[%c264, %c0_9] : memref<288x128xf32, #tpu.memory_space<vmem>>, vector<1x128xf32>
    %c272 = arith.constant 272 : index
    %c0_10 = arith.constant 0 : index
    %9 = vector.load %arg2[%c272, %c0_10] : memref<288x128xf32, #tpu.memory_space<vmem>>, vector<1x128xf32>
    %c280 = arith.constant 280 : index
    %c0_11 = arith.constant 0 : index
    %10 = vector.load %arg2[%c280, %c0_11] : memref<288x128xf32, #tpu.memory_space<vmem>>, vector<1x128xf32>
    %cst = arith.constant dense<0.000000e+00> : vector<16x128xf32>
    %11 = tpu.matmul %2, %5, %cst {dimension_numbers = #tpu.dot_dimension_numbers<[1], [0], [0], [1], [0, 0, 1, 1], [], []>} : vector<16x8xf32>, vector<8x128xf32>, vector<16x128xf32> -> vector<16x128xf32>
    %12 = vector.broadcast %8 : vector<1x128xf32> to vector<16x128xf32>
    %13 = arith.addf %11, %12 : vector<16x128xf32>
    %14 = math.tanh %13 : vector<16x128xf32>
    %cst_12 = arith.constant dense<0.000000e+00> : vector<16x128xf32>
    %15 = tpu.matmul %14, %6, %cst_12 {dimension_numbers = #tpu.dot_dimension_numbers<[1], [0], [0], [1], [0, 0, 1, 1], [], []>} : vector<16x128xf32>, vector<128x128xf32>, vector<16x128xf32> -> vector<16x128xf32>
    %16 = vector.broadcast %9 : vector<1x128xf32> to vector<16x128xf32>
    %17 = arith.addf %15, %16 : vector<16x128xf32>
    %18 = math.tanh %17 : vector<16x128xf32>
    %cst_13 = arith.constant dense<0.000000e+00> : vector<16x128xf32>
    %19 = tpu.matmul %18, %7, %cst_13 {dimension_numbers = #tpu.dot_dimension_numbers<[1], [0], [0], [1], [0, 0, 1, 1], [], []>} : vector<16x128xf32>, vector<128x128xf32>, vector<16x128xf32> -> vector<16x128xf32>
    %20 = vector.broadcast %10 : vector<1x128xf32> to vector<16x128xf32>
    %21 = arith.addf %19, %20 : vector<16x128xf32>
    %22 = vector.extract_strided_slice %21 {offsets = [0, 0], sizes = [16, 8], strides = [1, 1]} : vector<16x128xf32> to vector<16x8xf32>
    %23 = vector.extract_strided_slice %21 {offsets = [0, 8], sizes = [16, 1], strides = [1, 1]} : vector<16x128xf32> to vector<16x1xf32>
    %cst_14 = arith.constant 1.000000e-01 : f32
    %24 = arith.mulf %cst_14, %0 : f32
    %cst_15 = arith.constant 1.000000e+00 : f32
    %25 = arith.subf %cst_15, %24 : f32
    %26 = vector.broadcast %25 : f32 to vector<16x1xf32>
    %27 = arith.mulf %23, %26 : vector<16x1xf32>
    %cst_16 = arith.constant 5.000000e-01 : f32
    %28 = arith.mulf %cst_16, %0 : f32
    %29 = vector.broadcast %28 : f32 to vector<16x8xf32>
    %30 = arith.mulf %29, %22 : vector<16x8xf32>
    %31 = arith.subf %4, %30 : vector<16x8xf32>
    %32 = arith.mulf %22, %31 : vector<16x8xf32>
    %cst_17 = arith.constant dense<0.000000e+00> : vector<16xf32>
    %33 = vector.multi_reduction <add>, %32, %cst_17 [1] : vector<16x8xf32> to vector<16xf32>
    %34 = vector.shape_cast %33 : vector<16xf32> to vector<16x1xf32>
    %35 = arith.addf %27, %34 : vector<16x1xf32>
    %c0_18 = arith.constant 0 : index
    %c0_19 = arith.constant 0 : index
    %36 = vector.load %arg3[%c0_18, %c0_19] : memref<16x1xf32, #tpu.memory_space<vmem>>, vector<16x1xf32>
    tpu.vector_store %arg3[%c0_18, %c0_19], %35 {strides = array<i32>} : memref<16x1xf32, #tpu.memory_space<vmem>>, vector<16x1xf32>,
    return
  }
}

</mosaic_0001>

<llo_original>
// kernel: dbdp1_forward.1
$region0: #{dbdp1_forward.1}
  #allocation0 [shape = 'u32[]', space=smem, size = 0x4, offset = 0x4, fixed_abs, tag = 'smem constant byte address 0x4 - core index']
  #allocation1 [shape = 'u32[72,128]{1,0:T(1,128)}', space=vmem, size = 0x9000, scoped, tag = 'internal scratch']
  %s0 = inlined_call_operand.vmem [shape: f32[2], index: 0, kind: input, shape index: {}]
  %s1 = inlined_call_operand.vmem [shape: f32[2,16,8], index: 1, kind: input, shape index: {}]
  %s2 = inlined_call_operand.hbm [shape: f32[288,128], index: 2, kind: input, shape index: {}]
  %s3 = inlined_call_operand.vmem [shape: f32[16,1], index: 3, kind: output, shape index: {}]
  %s4 = sld [smem:[#allocation0]]
  $region30: #{dbdp1_forward.1} parent=0
    _
  %s6 = ssub.s32 1, %s4
  %s7 = scalar_select 0, %s6, %s4
  $region1: #{dbdp1_forward.1} parent=0
    #allocation2 [shape = 'u8[512]{0}', space=smem, size = 0x200, scoped, tag = 'input window, operand 0, single buffered']
    #allocation3 [shape = 's32[1]{0}', space=sflag, size = 0x4, scoped, tag = 'scoped memory for dbdp1_forward.1']
    #allocation4 [shape = 's32[1]{0}', space=sflag, size = 0x4, scoped, tag = 'scoped memory for dbdp1_forward.1']
    #allocation5 [shape = 'u8[147456]{0}', space=vmem, size = 0x24000, scoped, tag = 'input window, operand 2, single buffered']
    %8 = vsyncpa [#allocation4], 0
    %9 = vsyncpa [#allocation3], 0
    // Predicated region
    $region2: #{dbdp1_forward.1} parent=1 // pred_check
      _
    $region3: #{dbdp1_forward.1} parent=1 // pred_check_branch
      %11 = sbr.rel (0) target = $region5
    $region4: #{dbdp1_forward.1} parent=1 // pred_region
      %13 = vsyncadd [#allocation4], 0
      %s15 = sshll.u32 %s0, 4
      %s16 = int_to_ptr.vmem [resolvable:$true] %s15
      %18 = dma.vmem_to_smem %s16, 16, [#allocation2], [#allocation4]
    $region5: #{dbdp1_forward.1} parent=1 // pred_fallthru
      _
    // Predicated region
    $region6: #{dbdp1_forward.1} parent=1 // pred_check
      _
    $region7: #{dbdp1_forward.1} parent=1 // pred_check_branch
      %20 = sbr.rel (0) target = $region9
    $region8: #{dbdp1_forward.1} parent=1 // pred_region
      _
    $region9: #{dbdp1_forward.1} parent=1 // pred_fallthru
      _
    // Predicated region
    $region10: #{dbdp1_forward.1} parent=1 // pred_check
      _
    $region11: #{dbdp1_forward.1} parent=1 // pred_check_branch
      %22 = sbr.rel (0) target = $region13
    $region12: #{dbdp1_forward.1} parent=1 // pred_region
      %24 = vsyncadd [#allocation3], 0
      %s25 = sshll.u32 %s2, 4
      %s26 = int_to_ptr.hbm [resolvable:$true] %s25
      %s27 = sshll.u32 [#allocation5], 4
      %s28 = int_to_ptr.vmem [resolvable:$true] %s27
      %33 = dma.hbm_to_vmem [thread:$0]  %s26, 4608, %s28, [#allocation3], 128, 128, 8
    $region13: #{dbdp1_forward.1} parent=1 // pred_fallthru
      _
    // Predicated region
    $region14: #{dbdp1_forward.1} parent=1 // pred_check
      _
    $region15: #{dbdp1_forward.1} parent=1 // pred_check_branch
      %35 = sbr.rel (0) target = $region17
    $region16: #{dbdp1_forward.1} parent=1 // pred_region
      %37 = dma.done [#allocation4], 16
    $region17: #{dbdp1_forward.1} parent=1 // pred_fallthru
      _
    // Predicated region
    $region18: #{dbdp1_forward.1} parent=1 // pred_check
      _
    $region19: #{dbdp1_forward.1} parent=1 // pred_check_branch
      %39 = sbr.rel (0) target = $region21
    $region20: #{dbdp1_forward.1} parent=1 // pred_region
      %41 = dma.done [#allocation3], 4608
    $region21: #{dbdp1_forward.1} parent=1 // pred_fallthru
      _
    %42 = sfence
    %s43 = sld [smem:[#allocation2 + $0x1]]
    %v44 = vld [vmem:[%s1] sm:$0xff]
    %v45 = vld [vmem:[%s1 + $0x8] sm:$0xff]
    %s46 = scalar_lea.vmem %s1, 16
    %v47 = vld [vmem:[%s46] sm:$0xff]
    %v48 = vld [vmem:[%s46 + $0x8] sm:$0xff]
    %v49 = vld [vmem:[#allocation5] sm:$0xff]
    %v50 = vld [vmem:[#allocation5 + $0x8] sm:$0xff]
    %v51 = vld [vmem:[#allocation5 + $0x10] sm:$0xff]
    %v52 = vld [vmem:[#allocation5 + $0x18] sm:$0xff]
    %v53 = vld [vmem:[#allocation5 + $0x20] sm:$0xff]
    %v54 = vld [vmem:[#allocation5 + $0x28] sm:$0xff]
    %v55 = vld [vmem:[#allocation5 + $0x30] sm:$0xff]
    %v56 = vld [vmem:[#allocation5 + $0x38] sm:$0xff]
    %v57 = vld [vmem:[#allocation5 + $0x40] sm:$0xff]
    %v58 = vld [vmem:[#allocation5 + $0x48] sm:$0xff]
    %v59 = vld [vmem:[#allocation5 + $0x50] sm:$0xff]
    %v60 = vld [vmem:[#allocation5 + $0x58] sm:$0xff]
    %v61 = vld [vmem:[#allocation5 + $0x60] sm:$0xff]
    %v62 = vld [vmem:[#allocation5 + $0x68] sm:$0xff]
    %v63 = vld [vmem:[#allocation5 + $0x70] sm:$0xff]
    %v64 = vld [vmem:[#allocation5 + $0x78] sm:$0xff]
    %v65 = vld [vmem:[#allocation5 + $0x80] sm:$0xff]
    %v66 = vld [vmem:[#allocation5 + $0x88] sm:$0xff]
    %v67 = vld [vmem:[#allocation5 + $0x90] sm:$0xff]
    %v68 = vld [vmem:[#allocation5 + $0x98] sm:$0xff]
    %v69 = vld [vmem:[#allocation5 + $0xa0] sm:$0xff]
    %v70 = vld [vmem:[#allocation5 + $0xa8] sm:$0xff]
    %v71 = vld [vmem:[#allocation5 + $0xb0] sm:$0xff]
    %v72 = vld [vmem:[#allocation5 + $0xb8] sm:$0xff]
    %v73 = vld [vmem:[#allocation5 + $0xc0] sm:$0xff]
    %v74 = vld [vmem:[#allocation5 + $0xc8] sm:$0xff]
    %v75 = vld [vmem:[#allocation5 + $0xd0] sm:$0xff]
    %v76 = vld [vmem:[#allocation5 + $0xd8] sm:$0xff]
    %v77 = vld [vmem:[#allocation5 + $0xe0] sm:$0xff]
    %v78 = vld [vmem:[#allocation5 + $0xe8] sm:$0xff]
    %v79 = vld [vmem:[#allocation5 + $0xf0] sm:$0xff]
    %v80 = vld [vmem:[#allocation5 + $0xf8] sm:$0xff]
    %v81 = vld [vmem:[#allocation5 + $0x100] sm:$0xff]
    %v82 = vld [vmem:[#allocation5 + $0x108] sm:$0x1]
    %v83 = vld [vmem:[#allocation5 + $0x110] sm:$0x1]
    %v84 = vld [vmem:[#allocation5 + $0x118] sm:$0x1]
    %v85 = vperm.slane %v82, 0
    %vm86 = vcmask 64512
    %v88 = vsel %vm86, %v44, 0
    %v91 = vsel %vm86, %v45, 0
    %93 = vmatpush.msra.mxu0 0.0
    %94 = vmatpush.msra.mxu0 0.0
    %95 = vmatpush.msra.mxu0 0.0
    %96 = vmatpush.msra.mxu0 0.0
    %97 = vmatpush.msra.mxu0 0.0
    %98 = vmatpush.msra.mxu0 0.0
    %99 = vmatpush.msra.mxu0 0.0
    %100 = vmatpush.msra.mxu0 0.0
    %101 = vmatpush.msra.mxu0 0.0
    %102 = vmatpush.msra.mxu0 0.0
    %103 = vmatpush.msra.mxu0 0.0
    %104 = vmatpush.msra.mxu0 0.0
    %105 = vmatpush.msra.mxu0 0.0
    %106 = vmatpush.msra.mxu0 0.0
    %107 = vmatpush.msra.mxu0 0.0
    %108 = vmatpush.msra.mxu0 %v49
    %109 = vmatmul.f32.gmra.mxu0 %v88
    %v110 = vpop.f32.mrf.mxu0
    %v111 = vadd.f32 %v85, %v110
    %112 = vmatmul.f32.gmra.mxu0 %v91
    %v113 = vpop.f32.mrf.mxu0
    %v114 = vadd.f32 %v85, %v113
    %115 = vdwg.mxu0
    %v116 = vtanh.pop %v111
    %v117 = vtanh.pop %v114
    %v118 = vperm.slane %v83, 0
    %119 = vmatpush.msra.mxu0 %v65
    %120 = vmatpush.msra.mxu0 %v64
    %121 = vmatpush.msra.mxu0 %v63
    %122 = vmatpush.msra.mxu0 %v62
    %123 = vmatpush.msra.mxu0 %v61
    %124 = vmatpush.msra.mxu0 %v60
    %125 = vmatpush.msra.mxu0 %v59
    %126 = vmatpush.msra.mxu0 %v58
    %127 = vmatpush.msra.mxu0 %v57
    %128 = vmatpush.msra.mxu0 %v56
    %129 = vmatpush.msra.mxu0 %v55
    %130 = vmatpush.msra.mxu0 %v54
    %131 = vmatpush.msra.mxu0 %v53
    %132 = vmatpush.msra.mxu0 %v52
    %133 = vmatpush.msra.mxu0 %v51
    %134 = vmatpush.msra.mxu0 %v50
    %135 = vmatmul.f32.gmra.mxu0 %v116
    %v136 = vpop.f32.mrf.mxu0
    %v137 = vadd.f32 %v118, %v136
    %138 = vmatmul.f32.gmra.mxu0 %v117
    %v139 = vpop.f32.mrf.mxu0
    %v140 = vadd.f32 %v118, %v139
    %141 = vdwg.mxu0
    %v142 = vtanh.pop %v137
    %v143 = vtanh.pop %v140
    %v144 = vperm.slane %v84, 0
    %145 = vmatpush.msra.mxu0 %v81
    %146 = vmatpush.msra.mxu0 %v80
    %147 = vmatpush.msra.mxu0 %v79
    %148 = vmatpush.msra.mxu0 %v78
    %149 = vmatpush.msra.mxu0 %v77
    %150 = vmatpush.msra.mxu0 %v76
    %151 = vmatpush.msra.mxu0 %v75
    %152 = vmatpush.msra.mxu0 %v74
    %153 = vmatpush.msra.mxu0 %v73
    %154 = vmatpush.msra.mxu0 %v72
    %155 = vmatpush.msra.mxu0 %v71
    %156 = vmatpush.msra.mxu0 %v70
    %157 = vmatpush.msra.mxu0 %v69
    %158 = vmatpush.msra.mxu0 %v68
    %159 = vmatpush.msra.mxu0 %v67
    %160 = vmatpush.msra.mxu0 %v66
    %161 = vmatmul.f32.gmra.mxu0 %v142
    %v162 = vpop.f32.mrf.mxu0
    %v163 = vadd.f32 %v144, %v162
    %164 = vmatmul.f32.gmra.mxu0 %v143
    %v165 = vpop.f32.mrf.mxu0
    %v166 = vadd.f32 %v144, %v165
    %167 = vdwg.mxu0
    %s168 = smul.f32 %s43, 0.1
    %s169 = ssub.f32 1.0, %s168
    %v170 = vstv %s169
    %v171 = vmul.f32 %v163, %v170
    %v172 = vmul.f32 %v166, %v170
    %s173 = smul.f32 %s43, 0.5
    %v174 = vstv %s173
    %v175 = vmul.f32 %v174, %v163
    %v176 = vmul.f32 %v174, %v166
    %v177 = vsub.f32 %v47, %v175
    %v178 = vsub.f32 %v48, %v176
    %v179 = vmul.f32 %v163, %v177
    %v180 = vmul.f32 %v166, %v178
    %v181 = vsel %vm86, %v179, 0.0
    %182 = vadd.xlane.f32.xlu0 %v181
    %v183 = vpop.xlane.xlu0 %182
    %v184 = vsel %vm86, %v180, 0.0
    %185 = vadd.xlane.f32.xlu0 %v184
    %v186 = vpop.xlane.xlu0 %185
    %v187 = vadd.f32 %v171, %v183
    %v188 = vadd.f32 %v172, %v186
    %191 = vrot.lane.b32.xlu0 %v187, 120
    %v192 = vpop.permute.xlu0 %191
    %193 = vrot.lane.b32.xlu0 %v188, 120
    %v194 = vpop.permute.xlu0 %193
    %vm197 = vcmask 7168
    %198 = vst.msk [vmem:[%s3] sm:$0xff] %vm197, %v192
    %199 = vst.msk [vmem:[%s3 + $0x8] sm:$0xff] %vm197, %v194
    // Predicated region
    $region22: #{dbdp1_forward.1} parent=1 // pred_check
      _
    $region23: #{dbdp1_forward.1} parent=1 // pred_check_branch
      %201 = sbr.rel (0) target = $region25
    $region24: #{dbdp1_forward.1} parent=1 // pred_region
      _
    $region25: #{dbdp1_forward.1} parent=1 // pred_fallthru
      _
    // Predicated region
    $region26: #{dbdp1_forward.1} parent=1 // pred_check
      _
    $region27: #{dbdp1_forward.1} parent=1 // pred_check_branch
      %203 = sbr.rel (0) target = $region29
    $region28: #{dbdp1_forward.1} parent=1 // pred_region
      _
    $region29: #{dbdp1_forward.1} parent=1 // pred_fallthru
      _
    %204 = vsyncpa [#allocation3], 1
    %205 = vsyncpa [#allocation4], 1

</llo_original>
